<compile_context>
chip_gen: v7x
topology: tpu7x:2x2x1
jax: 0.10.0
libtpu: 0.0.40
codegen_flags: <defaults>
</compile_context>

<pallas_src>
import jax
import jax.numpy as jnp
from jax.experimental import pallas as pl
from jax.experimental.pallas import tpu as pltpu


def _round_up(x, m):
    return ((x + m - 1) // m) * m


def _vmem_capacity_bytes():
    try:
        return int(pltpu.get_tpu_info().vmem_capacity_bytes)
    except Exception:
        return 64 << 20          # conservative default == v7x per-TC VMEM


# ---------------------------------------------------------------------------
# Kernels
# ---------------------------------------------------------------------------
def _cls_head_kernel_o1(x_ref, w_ref, b_ref, o_ref):
    """output_dim == 1: VPU broadcast-multiply + XLU lane reduce (no MXU).

    x_ref: [tm, H]   w_ref: [1, H]   b_ref: [1, 1]   o_ref: [tm, 1]
    """
    x = x_ref[...].astype(jnp.float32)
    w = w_ref[...].astype(jnp.float32)
    logits = jnp.sum(x * w, axis=-1, keepdims=True) + b_ref[...].astype(jnp.float32)
    o_ref[...] = jax.nn.sigmoid(logits).astype(o_ref.dtype)


def _cls_head_kernel_mxu(x_ref, w_ref, b_ref, o_ref):
    """General path: contract over H, weight kept in PyTorch [O, H] layout.

    x_ref: [tm, H]   w_ref: [tn, H]   b_ref: [1, tn]   o_ref: [tm, tn]
    """
    logits = jax.lax.dot_general(
        x_ref[...], w_ref[...],
        dimension_numbers=(((1,), (1,)), ((), ())),   # contract H with H
        preferred_element_type=jnp.float32)
    logits = logits + b_ref[...].astype(jnp.float32)   # bias added once, f32
    o_ref[...] = jax.nn.sigmoid(logits).astype(o_ref.dtype)


# ---------------------------------------------------------------------------
# Wrapper
# ---------------------------------------------------------------------------
def classification_head(x, weight, bias, *, compute_dtype=None, tm_max=1024):
    """Forward of ClassificationHead (eval mode): sigmoid(x @ W^T + b).

    x:      [B, H]
    weight: [O, H]   (PyTorch nn.Linear layout; never transposed in HBM)
    bias:   [O]
    returns [B, O]
    """
    B, H = x.shape
    O, Hw = weight.shape
    assert Hw == H and bias.shape == (O,)

    out_dtype = x.dtype
    if compute_dtype is not None:
        # Optional bandwidth saver (e.g. bf16): halves operand HBM traffic on
        # the mem-bound path; f32 accumulation is kept inside the kernel.
        x = x.astype(compute_dtype)
        weight = weight.astype(compute_dtype)

    x_item = jnp.dtype(x.dtype).itemsize
    w_item = jnp.dtype(weight.dtype).itemsize
    o_item = jnp.dtype(out_dtype).itemsize

    vmem_cap = _vmem_capacity_bytes()
    budget = int(vmem_cap * 0.6)        # headroom for double buffers + misc

    def pick_tm(per_row_bytes, fixed_bytes):
        """Batch tile: multiple of 8, >= ~4 tiles when B allows, VMEM-capped."""
        if B <= 8:
            return B                    # block == full batch dim (legal)
        target = min(tm_max, _round_up(pl.cdiv(B, 4), 8))
        avail = max(budget - fixed_bytes, 8 * per_row_bytes)
        by_budget = max(8, (avail // per_row_bytes) // 8 * 8)
        return int(max(8, min(target, by_budget)))

    if O == 1:
        # Degenerate head: MXU would be ~1/256 utilized -> purely streaming,
        # HBM-bound on x.  (Lane-dense output slab deliberately skipped: the
        # output is B*4 bytes, negligible.)
        per_row = 2 * H * x_item + 2 * o_item
        fixed = 2 * H * w_item + 4096
        tm = pick_tm(per_row, fixed)
        grid = (pl.cdiv(B, tm),)
        in_specs = [
            pl.BlockSpec((tm, H), lambda i: (i, 0)),
            pl.BlockSpec((1, H), lambda i: (0, 0)),    # weight row VMEM-resident
            pl.BlockSpec((1, 1), lambda i: (0, 0)),    # bias VMEM-resident
        ]
        out_specs = pl.BlockSpec((tm, 1), lambda i: (i, 0))
        kernel = _cls_head_kernel_o1
        dims = ("parallel",)
        out_cols = 1
        w_arg, b_arg = weight, bias.reshape(1, 1)
        est = fixed + tm * per_row
    else:
        # Lane-dense output: pad O up to a multiple of 128 with zeros (the
        # padded sigmoid(0)=0.5 columns are sliced off afterwards).
        O_pad = _round_up(O, 128)
        if O_pad != O:
            weight = jnp.zeros((O_pad, H), weight.dtype).at[:O, :].set(weight)
            bias = jnp.zeros((O_pad,), bias.dtype).at[:O].set(bias)
        b2 = bias.reshape(1, O_pad)
        w_dbuf = 2 * O_pad * H * w_item          # BlockSpec double-buffers

        if w_dbuf <= budget // 2:
            # Common case (classification heads): the whole weight fits VMEM;
            # the O grid collapses to 1 so W is read from HBM exactly once.
            tn = O_pad
            per_row = 2 * H * x_item + 2 * tn * o_item
            fixed = w_dbuf + 2 * tn * 4 + 4096
            tm = pick_tm(per_row, fixed)
            grid = (pl.cdiv(B, tm),)
            in_specs = [
                pl.BlockSpec((tm, H), lambda i: (i, 0)),
                pl.BlockSpec((tn, H), lambda i: (0, 0)),   # pinned -> resident
                pl.BlockSpec((1, tn), lambda i: (0, 0)),
            ]
            out_specs = pl.BlockSpec((tm, tn), lambda i: (i, 0))
            dims = ("parallel",)
        else:
            # Huge head: tile O on the *outer* axis (each W tile fetched once),
            # batch on the inner "fast" axis.
            tn = max(128, min(O_pad,
                              ((budget // 2) // (2 * H * w_item)) // 128 * 128))
            per_row = 2 * H * x_item + 2 * tn * o_item
            fixed = 2 * tn * H * w_item + 2 * tn * 4 + 4096
            tm = pick_tm(per_row, fixed)
            grid = (pl.cdiv(O_pad, tn), pl.cdiv(B, tm))
            in_specs = [
                pl.BlockSpec((tm, H), lambda jo, ib: (ib, 0)),
                pl.BlockSpec((tn, H), lambda jo, ib: (jo, 0)),
                pl.BlockSpec((1, tn), lambda jo, ib: (0, jo)),
            ]
            out_specs = pl.BlockSpec((tm, tn), lambda jo, ib: (ib, jo))
            dims = ("parallel", "parallel")
        kernel = _cls_head_kernel_mxu
        out_cols = O_pad
        w_arg, b_arg = weight, b2
        est = fixed + tm * per_row

    # Explicit scoped-VMEM limit: above the 16 MiB (v5e) / 32 MiB (v6e, v7x)
    # defaults, below physical capacity, sized from the actual tile footprint.
    vmem_limit = int(min(vmem_cap * 0.85, max(32 << 20, est * 1.5)))

    out = pl.pallas_call(
        kernel,
        out_shape=jax.ShapeDtypeStruct((B, out_cols), out_dtype),
        grid_spec=pltpu.PrefetchScalarGridSpec(
            num_scalar_prefetch=0,
            grid=grid,
            in_specs=in_specs,
            out_specs=out_specs,
        ),
        compiler_params=pltpu.CompilerParams(
            dimension_semantics=dims,
            vmem_limit_bytes=vmem_limit),
    )(x, w_arg, b_arg)

    return out[:, :O] if out_cols != O else out


# ---------------------------------------------------------------------------
# Reference & test
# ---------------------------------------------------------------------------
def _ref_forward(x, weight, bias):
    logits = jax.lax.dot_general(
        x, weight,
        dimension_numbers=(((1,), (1,)), ((), ())),
        precision=jax.lax.Precision.HIGHEST) + bias
    return jax.nn.sigmoid(logits)


if __name__ == "__main__":
    key = jax.random.PRNGKey(0)

    # --- Case 1: module default (output_dim=1) -> VPU/XLU path ---------------
    k1, k2, k3, key = jax.random.split(key, 4)
    B, H, O = 8, 32, 1
    x = jax.random.normal(k1, (B, H), jnp.float32)
    w = jax.random.normal(k2, (O, H), jnp.float32) * 0.1
    b = jax.random.normal(k3, (O,), jnp.float32) * 0.1
    out = jax.block_until_ready(classification_head(x, w, b))
    assert out.shape == (B, O)
    assert jnp.allclose(out, _ref_forward(x, w, b), atol=1e-4, rtol=1e-4)

    # --- Case 2: 1 < O < 128 -> padded lane-dense MXU path, 2 batch tiles ----
    k1, k2, k3, key = jax.random.split(key, 4)
    B, H, O = 16, 128, 5
    x = jax.random.normal(k1, (B, H), jnp.float32)
    w = jax.random.normal(k2, (O, H), jnp.float32) * 0.05
    b = jax.random.normal(k3, (O,), jnp.float32) * 0.05
    out = jax.block_until_ready(classification_head(x, w, b))
    assert out.shape == (B, O)
    # MXU default precision vs. HIGHEST in the reference: tolerance relaxed on
    # purpose (per review).  Pass compute_dtype=jnp.bfloat16 for max bandwidth.
    assert jnp.allclose(out, _ref_forward(x, w, b), atol=2e-3, rtol=2e-3)

    # --- Case 3: wide head (O multiple of 128) -> collapsed O grid -----------
    k1, k2, k3, key = jax.random.split(key, 4)
    B, H, O = 16, 128, 256
    x = jax.random.normal(k1, (B, H), jnp.float32)
    w = jax.random.normal(k2, (O, H), jnp.float32) * 0.05
    b = jax.random.normal(k3, (O,), jnp.float32) * 0.05
    out = jax.block_until_ready(classification_head(x, w, b))
    assert out.shape == (B, O)
    assert jnp.allclose(out, _ref_forward(x, w, b), atol=2e-3, rtol=2e-3)

    print("KERNEL_OK")
</pallas_src>

<mosaic_0001>
module attributes {stable_mosaic.version = 11 : i64} {
  func.func @_cls_head_kernel_o1(%arg0: i32, %arg1: memref<8x32xf32, #tpu.memory_space<vmem>>, %arg2: memref<1x32xf32, #tpu.memory_space<vmem>>, %arg3: memref<1x1xf32, #tpu.memory_space<vmem>>, %arg4: memref<8x1xf32, #tpu.memory_space<vmem>>) attributes {dimension_semantics = [#tpu.dimension_semantics<parallel>], iteration_bounds = array<i64: 1>, scalar_prefetch = 0 : i64, scratch_operands = 0 : i64, tpu.core_type = #tpu.core_type<tc>, window_params = [{transform_indices = @transform_0, window_bounds = array<i64: 8, 32>}, {pipeline_mode = #tpu.pipeline_mode<synchronous>, transform_indices = @transform_1, window_bounds = array<i64: 1, 32>}, {pipeline_mode = #tpu.pipeline_mode<synchronous>, transform_indices = @transform_2, window_bounds = array<i64: 1, 1>}, {transform_indices = @transform_3, window_bounds = array<i64: 8, 1>}]} {
    %c0 = arith.constant 0 : index
    %c0_0 = arith.constant 0 : index
    %0 = vector.load %arg1[%c0, %c0_0] : memref<8x32xf32, #tpu.memory_space<vmem>>, vector<8x32xf32>
    %c0_1 = arith.constant 0 : index
    %c0_2 = arith.constant 0 : index
    %1 = vector.load %arg2[%c0_1, %c0_2] : memref<1x32xf32, #tpu.memory_space<vmem>>, vector<1x32xf32>
    %2 = vector.broadcast %1 : vector<1x32xf32> to vector<8x32xf32>
    %3 = arith.mulf %0, %2 : vector<8x32xf32>
    %cst = arith.constant dense<0.000000e+00> : vector<8xf32>
    %4 = vector.multi_reduction <add>, %3, %cst [1] : vector<8x32xf32> to vector<8xf32>
    %5 = vector.shape_cast %4 : vector<8xf32> to vector<8x1xf32>
    %c0_3 = arith.constant 0 : index
    %c0_4 = arith.constant 0 : index
    %6 = vector.load %arg3[%c0_3, %c0_4] : memref<1x1xf32, #tpu.memory_space<vmem>>, vector<1x1xf32>
    %7 = vector.broadcast %6 : vector<1x1xf32> to vector<8x1xf32>
    %8 = arith.addf %5, %7 : vector<8x1xf32>
    %9 = arith.negf %8 : vector<8x1xf32>
    %10 = math.exp %9 : vector<8x1xf32>
    %cst_5 = arith.constant 1.000000e+00 : f32
    %11 = vector.broadcast %cst_5 : f32 to vector<8x1xf32>
    %12 = arith.addf %11, %10 : vector<8x1xf32>
    %13 = arith.divf %11, %12 : vector<8x1xf32>
    %c0_6 = arith.constant 0 : index
    %c0_7 = arith.constant 0 : index
    %14 = vector.load %arg4[%c0_6, %c0_7] : memref<8x1xf32, #tpu.memory_space<vmem>>, vector<8x1xf32>
    tpu.vector_store %arg4[%c0_6, %c0_7], %13 {strides = array<i32>} : memref<8x1xf32, #tpu.memory_space<vmem>>, vector<8x1xf32>,
    return
  }
  func.func @transform_0(%arg0: i32) -> (i32, i32) {
    %c0_i32 = arith.constant 0 : i32
    %c0_i32_0 = arith.constant 0 : i32
    return %arg0, %c0_i32 : i32, i32
  }
  func.func @transform_1(%arg0: i32) -> (i32, i32) {
    %c0_i32 = arith.constant 0 : i32
    %c0_i32_0 = arith.constant 0 : i32
    %c0_i32_1 = arith.constant 0 : i32
    return %c0_i32, %c0_i32_0 : i32, i32
  }
  func.func @transform_2(%arg0: i32) -> (i32, i32) {
    %c0_i32 = arith.constant 0 : i32
    %c0_i32_0 = arith.constant 0 : i32
    %c0_i32_1 = arith.constant 0 : i32
    return %c0_i32, %c0_i32_0 : i32, i32
  }
  func.func @transform_3(%arg0: i32) -> (i32, i32) {
    %c0_i32 = arith.constant 0 : i32
    %c0_i32_0 = arith.constant 0 : i32
    return %arg0, %c0_i32 : i32, i32
  }
}

</mosaic_0001>

<llo_original>
// kernel: tpu_custom_call.1
$region0: #{tpu_custom_call.1}
  #allocation0 [shape = 'u32[]', space=smem, size = 0x4, offset = 0x4, fixed_abs, tag = 'smem constant byte address 0x4 - core index']
  #allocation1 [shape = 'u32[144,128]{1,0:T(1,128)}', space=vmem, size = 0x12000, scoped, tag = 'internal scratch']
  #allocation2 [shape = 'f32[1,1]{1,0:T(1,128)S(1)}', space=vmem, size = 0x200, scoped, tag = 'scoped memory for tpu_custom_call.1']
  %s0 = inlined_call_operand.hbm [shape: f32[8,32], index: 0, kind: input, shape index: {}]
  %s1 = inlined_call_operand.vmem [shape: f32[1,32], index: 1, kind: input, shape index: {}]
  %s2 = inlined_call_operand.<no memory space> [shape: f32[1,1], index: 2, kind: input, shape index: {}]
  %s3 = inlined_call_operand.vmem [shape: f32[8,1], index: 3, kind: output, shape index: {}]
  %s4 = sld [smem:[#allocation0]]
  $region26: #{tpu_custom_call.1} parent=0
    _
  %s6 = ssub.s32 1, %s4
  %s7 = scalar_select 0, %s6, %s4
  %v8 = vstv %s2
  %9 = vst [vmem:[#allocation2] sm:$0x1] %v8
  $region1: #{tpu_custom_call.1} parent=0
    #allocation3 [shape = 'u8[4096]{0}', space=vmem, size = 0x1000, scoped, tag = 'input window, operand 0, single buffered']
    #allocation4 [shape = 's32[1]{0}', space=sflag, size = 0x4, scoped, tag = 'scoped memory for tpu_custom_call.1']
    %10 = vsyncpa [#allocation4], 0
    // Predicated region
    $region2: #{tpu_custom_call.1} parent=1 // pred_check
      _
    $region3: #{tpu_custom_call.1} parent=1 // pred_check_branch
      %12 = sbr.rel (0) target = $region5
    $region4: #{tpu_custom_call.1} parent=1 // pred_region
      %s14 = ssub.s32 128, 128
      %15 = vsyncadd [#allocation4], %s14
      %s17 = sshll.u32 [#allocation3], 4
      %s18 = int_to_ptr.vmem [resolvable:$true] %s17
      %20 = dma.hbm_to_vmem [thread:$0]  %s0, 128, %s18, [#allocation4]
    $region5: #{tpu_custom_call.1} parent=1 // pred_fallthru
      _
    // Predicated region
    $region6: #{tpu_custom_call.1} parent=1 // pred_check
      _
    $region7: #{tpu_custom_call.1} parent=1 // pred_check_branch
      %22 = sbr.rel (0) target = $region9
    $region8: #{tpu_custom_call.1} parent=1 // pred_region
      _
    $region9: #{tpu_custom_call.1} parent=1 // pred_fallthru
      _
    // Predicated region
    $region10: #{tpu_custom_call.1} parent=1 // pred_check
      _
    $region11: #{tpu_custom_call.1} parent=1 // pred_check_branch
      %24 = sbr.rel (0) target = $region13
    $region12: #{tpu_custom_call.1} parent=1 // pred_region
      _
    $region13: #{tpu_custom_call.1} parent=1 // pred_fallthru
      _
    // Predicated region
    $region14: #{tpu_custom_call.1} parent=1 // pred_check
      _
    $region15: #{tpu_custom_call.1} parent=1 // pred_check_branch
      %26 = sbr.rel (0) target = $region17
    $region16: #{tpu_custom_call.1} parent=1 // pred_region
      %27 = dma.done [#allocation4], 128
    $region17: #{tpu_custom_call.1} parent=1 // pred_fallthru
      _
    %v28 = vld [vmem:[#allocation3] sm:$0xff]
    %v29 = vld [vmem:[%s1] sm:$0x1]
    %v31 = vlaneseq
    %v32 = vshrl.u32 %v31, 7
    %v33 = vsub.s32 0, %v32
    %v34 = vrot.slane %v29, %v33
    %v36 = vmul.f32 %v28, %v34
    %vm37 = vcmask 261120
    %v38 = vsel %vm37, %v36, 0.0
    %39 = vadd.xlane.f32.xlu0 %v38
    %v40 = vpop.xlane.xlu0 %39
    %v41 = vld [vmem:[#allocation2] sm:$0x1]
    %v43 = vlaneseq
    %v44 = vshrl.u32 %v43, 7
    %v45 = vsub.s32 0, %v44
    %v46 = vrot.slane %v41, %v45
    %v48 = vadd.f32 %v40, %v46
    %v49 = vxor.u32 %v48, 2147483648
    %v50 = vmul.f32 %v49, 1.442695
    %v51 = vpow.pop %v50
    %v52 = vadd.f32 %v51, 1.0
    %v53 = vrcp.pop %v52
    %v54 = vmul.f32 1.0, %v53
    %vm55 = vcmask 7168
    %56 = vst.msk [vmem:[%s3] sm:$0xff] %vm55, %v54
    // Predicated region
    $region18: #{tpu_custom_call.1} parent=1 // pred_check
      _
    $region19: #{tpu_custom_call.1} parent=1 // pred_check_branch
      %58 = sbr.rel (0) target = $region21
    $region20: #{tpu_custom_call.1} parent=1 // pred_region
      _
    $region21: #{tpu_custom_call.1} parent=1 // pred_fallthru
      _
    // Predicated region
    $region22: #{tpu_custom_call.1} parent=1 // pred_check
      _
    $region23: #{tpu_custom_call.1} parent=1 // pred_check_branch
      %60 = sbr.rel (0) target = $region25
    $region24: #{tpu_custom_call.1} parent=1 // pred_region
      _
    $region25: #{tpu_custom_call.1} parent=1 // pred_fallthru
      _
    %61 = vsyncpa [#allocation4], 1

</llo_original>
